<compile_context>
chip_gen: v6e
topology: v6e:2x2x1
jax: 0.10.0
libtpu: 0.0.40
codegen_flags: <defaults>
</compile_context>

<pallas_src>
import math
import jax
import jax.numpy as jnp
from jax.experimental import pallas as pl
from jax.experimental.pallas import tpu as pltpu


def _round_up(n, m):
    return ((n + m - 1) // m) * m


# ----------------------------------------------------------------------------
# Kernel
# ----------------------------------------------------------------------------
def _make_dbn_kernel(num_layers):
    """Fused: o = sigmoid(...sigmoid(x @ W0 + b0)... @ W_{L-1} + b_{L-1})."""

    def kernel(*refs):
        x_ref = refs[0]
        o_ref = refs[-1]
        wb_refs = refs[1:-1]              # (W0, b0, W1, b1, ...)
        a = x_ref[...]                    # (TM, P0) f32 activation tile
        for layer in range(num_layers):
            w = wb_refs[2 * layer][...]        # (P_l, P_{l+1}) bf16, VMEM-resident
            b = wb_refs[2 * layer + 1][...]    # (1,  P_{l+1}) f32
            acc = jnp.dot(a.astype(jnp.bfloat16), w,
                          preferred_element_type=jnp.float32)   # bf16 MXU, f32 acc
            a = jax.nn.sigmoid(acc + b)        # f32 epilogue (EUP)
        o_ref[...] = a.astype(o_ref.dtype)

    return kernel


# ----------------------------------------------------------------------------
# One-time parameter preparation (hoisted out of the forward pass)
# ----------------------------------------------------------------------------
def prepare_dbn_params(params, in_dim):
    """Pad to 128-multiples and cast weights to bf16 ONCE.

    params: list of (W (Nv_l, Nh_l) f32, h_bias (Nh_l,) f32)
    in_dim: feature dim of the input the DBN will see (Nv of layer 0).
    """
    num_layers = len(params)
    dims = [in_dim] + [W.shape[1] for (W, _) in params]
    for layer, (W, _) in enumerate(params):
        assert W.shape[0] == dims[layer], (layer, W.shape, dims)
    pdims = [_round_up(d, 128) for d in dims]

    flat_params = []
    for layer, (W, hb) in enumerate(params):
        Wp = (jnp.zeros((pdims[layer], pdims[layer + 1]), jnp.bfloat16)
              .at[:dims[layer], :dims[layer + 1]].set(W.astype(jnp.bfloat16)))
        bp = (jnp.zeros((1, pdims[layer + 1]), jnp.float32)
              .at[:, :dims[layer + 1]].set(hb.reshape(1, -1).astype(jnp.float32)))
        flat_params += [Wp, bp]

    return dict(num_layers=num_layers, dims=dims, pdims=pdims,
                flat_params=flat_params)


# ----------------------------------------------------------------------------
# Forward pass
# ----------------------------------------------------------------------------
_VMEM_BUDGET = 48 << 20      # conservative cap that fits v7x's 64 MiB/TC


def _vmem_estimate(tm, pdims, param_bytes):
    est = param_bytes                                   # weights/biases, 1 buffer
    est += 2 * 4 * tm * pdims[0]                        # double-buffered input tiles
    est += 2 * 4 * tm * pdims[-1]                       # double-buffered output tiles
    est += sum(6 * tm * p for p in pdims)               # f32 act + bf16 cast temporaries
    return est


def dbn_forward(x, prepared, *, tm=256):
    """DBN.forward fused into one Pallas kernel.

    x:        (B, Nv0) float32
    prepared: output of prepare_dbn_params
    Returns (B, Nh_last) float32.
    """
    num_layers = prepared["num_layers"]
    dims, pdims = prepared["dims"], prepared["pdims"]
    flat_params = prepared["flat_params"]

    # RBM.encode reshape guard for the first layer.
    if x.shape[1] != dims[0]:
        x = x.reshape(-1, dims[0])
    B = x.shape[0]

    # Batch tile: multiple of 8, at least 2 grid steps when possible so both
    # v7x TensorCores get work (axis marked "parallel").
    tm_eff = _round_up(min(tm, B), 8)
    if B > 8 and _round_up(B, tm_eff) // tm_eff < 2:
        tm_eff = _round_up((B + 1) // 2, 8)

    # Shrink TM until the plan fits the conservative VMEM budget.
    param_bytes = sum(p.size * p.dtype.itemsize for p in flat_params)
    while tm_eff > 8 and _vmem_estimate(tm_eff, pdims, param_bytes) > _VMEM_BUDGET:
        tm_eff = max(8, _round_up(tm_eff // 2, 8))
    est = _vmem_estimate(tm_eff, pdims, param_bytes)
    assert est <= _VMEM_BUDGET, f"resident VMEM estimate {est} exceeds budget"

    Bp = _round_up(B, tm_eff)
    x_p = (jnp.zeros((Bp, pdims[0]), jnp.float32)
           .at[:B, :dims[0]].set(x.astype(jnp.float32)))

    # BlockSpecs: batch-tiled x/out; weights/biases resident with a single buffer
    # (index_map is constant, nothing to pipeline).
    in_specs = [pl.BlockSpec((tm_eff, pdims[0]), lambda i: (i, 0))]
    for layer in range(num_layers):
        in_specs.append(pl.BlockSpec((pdims[layer], pdims[layer + 1]),
                                     lambda i: (0, 0),
                                     pipeline_mode=pl.Buffered(1)))
        in_specs.append(pl.BlockSpec((1, pdims[layer + 1]),
                                     lambda i: (0, 0),
                                     pipeline_mode=pl.Buffered(1)))
    out_spec = pl.BlockSpec((tm_eff, pdims[-1]), lambda i: (i, 0))

    flops = sum(2 * Bp * pdims[l] * pdims[l + 1] for l in range(num_layers))
    transcendentals = sum(Bp * pdims[l + 1] for l in range(num_layers))
    bytes_accessed = (4 * Bp * pdims[0] + 4 * Bp * pdims[-1] + param_bytes)

    vmem_limit = int(min(max(2 * est, 32 << 20), _VMEM_BUDGET))

    out_p = pl.pallas_call(
        _make_dbn_kernel(num_layers),
        out_shape=jax.ShapeDtypeStruct((Bp, pdims[-1]), jnp.float32),
        grid=(Bp // tm_eff,),
        in_specs=in_specs,
        out_specs=out_spec,
        compiler_params=pltpu.CompilerParams(
            dimension_semantics=("parallel",),
            vmem_limit_bytes=vmem_limit),
        cost_estimate=pl.CostEstimate(
            flops=flops,
            transcendentals=transcendentals,
            bytes_accessed=bytes_accessed),
    )(x_p, *flat_params)

    # Slice off batch / lane padding in the wrapper (layout plumbing only).
    return out_p[:B, :dims[-1]]


# ----------------------------------------------------------------------------
# Parameter construction (matches the PyTorch init: xavier_uniform W, zero bias)
# ----------------------------------------------------------------------------
def xavier_uniform(key, n_in, n_out):
    limit = math.sqrt(6.0 / (n_in + n_out))
    return jax.random.uniform(key, (n_in, n_out), jnp.float32, -limit, limit)


def make_dbn_params(key, layer_dims):
    """layer_dims: list of (n_visible, n_hidden) per RBM layer."""
    params = []
    for (nv, nh) in layer_dims:
        key, sub = jax.random.split(key)
        W = xavier_uniform(sub, nv, nh)
        h_bias = jnp.zeros((nh,), jnp.float32)
        params.append((W, h_bias))
    return params


if __name__ == "__main__":
    key = jax.random.PRNGKey(0)
    key, kx = jax.random.split(key)

    # Small DBN-consistent shapes: layer 1 D->D, shrinking, last hidden = 1.
    batch, D = 64, 32
    layer_dims = [(32, 32), (32, 16), (16, 1)]   # num_layers = 3

    x = jax.random.uniform(kx, (batch, D), jnp.float32)
    params = make_dbn_params(key, layer_dims)
    prepared = prepare_dbn_params(params, D)      # pad + bf16-cast ONCE

    out = dbn_forward(x, prepared, tm=256)        # grid forced to (2,) here
    out = jax.block_until_ready(out)
    assert out.shape == (batch, 1), out.shape

    # Reference in matching precision (bf16 matmul operands, f32 accumulation).
    ref = x
    for (W, b) in params:
        ref = jax.nn.sigmoid(
            jnp.dot(ref.astype(jnp.bfloat16), W.astype(jnp.bfloat16),
                    preferred_element_type=jnp.float32) + b)
    assert jnp.allclose(out, ref, atol=5e-3), float(jnp.max(jnp.abs(out - ref)))

    # Loose sanity check against the pure-f32 reference (bf16-level tolerance).
    ref32 = x
    for (W, b) in params:
        ref32 = jax.nn.sigmoid(ref32 @ W + b)
    assert jnp.allclose(out, ref32, atol=2e-2), float(jnp.max(jnp.abs(out - ref32)))

    print("KERNEL_OK")
</pallas_src>

<mosaic_0001>
module attributes {stable_mosaic.version = 11 : i64} {
  func.func @kernel(%arg0: i32, %arg1: memref<32x128xf32, #tpu.memory_space<vmem>>, %arg2: memref<128x128xbf16, #tpu.memory_space<vmem>>, %arg3: memref<1x128xf32, #tpu.memory_space<vmem>>, %arg4: memref<128x128xbf16, #tpu.memory_space<vmem>>, %arg5: memref<1x128xf32, #tpu.memory_space<vmem>>, %arg6: memref<128x128xbf16, #tpu.memory_space<vmem>>, %arg7: memref<1x128xf32, #tpu.memory_space<vmem>>, %arg8: memref<32x128xf32, #tpu.memory_space<vmem>>) attributes {dimension_semantics = [#tpu.dimension_semantics<parallel>], iteration_bounds = array<i64: 2>, scalar_prefetch = 0 : i64, scratch_operands = 0 : i64, tpu.core_type = #tpu.core_type<tc>, window_params = [{transform_indices = @transform_0, window_bounds = array<i64: 32, 128>}, {pipeline_mode = #tpu.pipeline_mode<synchronous>, transform_indices = @transform_1, window_bounds = array<i64: 128, 128>}, {pipeline_mode = #tpu.pipeline_mode<synchronous>, transform_indices = @transform_2, window_bounds = array<i64: 1, 128>}, {pipeline_mode = #tpu.pipeline_mode<synchronous>, transform_indices = @transform_3, window_bounds = array<i64: 128, 128>}, {pipeline_mode = #tpu.pipeline_mode<synchronous>, transform_indices = @transform_4, window_bounds = array<i64: 1, 128>}, {pipeline_mode = #tpu.pipeline_mode<synchronous>, transform_indices = @transform_5, window_bounds = array<i64: 128, 128>}, {pipeline_mode = #tpu.pipeline_mode<synchronous>, transform_indices = @transform_6, window_bounds = array<i64: 1, 128>}, {transform_indices = @transform_7, window_bounds = array<i64: 32, 128>}]} {
    %c0 = arith.constant 0 : index
    %c0_0 = arith.constant 0 : index
    %0 = vector.load %arg1[%c0, %c0_0] : memref<32x128xf32, #tpu.memory_space<vmem>>, vector<32x128xf32>
    %c0_1 = arith.constant 0 : index
    %c0_2 = arith.constant 0 : index
    %1 = vector.load %arg2[%c0_1, %c0_2] : memref<128x128xbf16, #tpu.memory_space<vmem>>, vector<128x128xbf16>
    %c0_3 = arith.constant 0 : index
    %c0_4 = arith.constant 0 : index
    %2 = vector.load %arg3[%c0_3, %c0_4] : memref<1x128xf32, #tpu.memory_space<vmem>>, vector<1x128xf32>
    %3 = arith.truncf %0 : vector<32x128xf32> to vector<32x128xbf16>
    %cst = arith.constant dense<0.000000e+00> : vector<32x128xf32>
    %4 = tpu.matmul %3, %1, %cst {dimension_numbers = #tpu.dot_dimension_numbers<[1], [0], [0], [1], [0, 0, 1, 1], [], []>} : vector<32x128xbf16>, vector<128x128xbf16>, vector<32x128xf32> -> vector<32x128xf32>
    %5 = vector.broadcast %2 : vector<1x128xf32> to vector<32x128xf32>
    %6 = arith.addf %4, %5 : vector<32x128xf32>
    %7 = arith.negf %6 : vector<32x128xf32>
    %8 = math.exp %7 : vector<32x128xf32>
    %cst_5 = arith.constant 1.000000e+00 : f32
    %9 = vector.broadcast %cst_5 : f32 to vector<32x128xf32>
    %10 = arith.addf %9, %8 : vector<32x128xf32>
    %11 = arith.divf %9, %10 : vector<32x128xf32>
    %c0_6 = arith.constant 0 : index
    %c0_7 = arith.constant 0 : index
    %12 = vector.load %arg4[%c0_6, %c0_7] : memref<128x128xbf16, #tpu.memory_space<vmem>>, vector<128x128xbf16>
    %c0_8 = arith.constant 0 : index
    %c0_9 = arith.constant 0 : index
    %13 = vector.load %arg5[%c0_8, %c0_9] : memref<1x128xf32, #tpu.memory_space<vmem>>, vector<1x128xf32>
    %14 = arith.truncf %11 : vector<32x128xf32> to vector<32x128xbf16>
    %cst_10 = arith.constant dense<0.000000e+00> : vector<32x128xf32>
    %15 = tpu.matmul %14, %12, %cst_10 {dimension_numbers = #tpu.dot_dimension_numbers<[1], [0], [0], [1], [0, 0, 1, 1], [], []>} : vector<32x128xbf16>, vector<128x128xbf16>, vector<32x128xf32> -> vector<32x128xf32>
    %16 = vector.broadcast %13 : vector<1x128xf32> to vector<32x128xf32>
    %17 = arith.addf %15, %16 : vector<32x128xf32>
    %18 = arith.negf %17 : vector<32x128xf32>
    %19 = math.exp %18 : vector<32x128xf32>
    %cst_11 = arith.constant 1.000000e+00 : f32
    %20 = vector.broadcast %cst_11 : f32 to vector<32x128xf32>
    %21 = arith.addf %20, %19 : vector<32x128xf32>
    %22 = arith.divf %20, %21 : vector<32x128xf32>
    %c0_12 = arith.constant 0 : index
    %c0_13 = arith.constant 0 : index
    %23 = vector.load %arg6[%c0_12, %c0_13] : memref<128x128xbf16, #tpu.memory_space<vmem>>, vector<128x128xbf16>
    %c0_14 = arith.constant 0 : index
    %c0_15 = arith.constant 0 : index
    %24 = vector.load %arg7[%c0_14, %c0_15] : memref<1x128xf32, #tpu.memory_space<vmem>>, vector<1x128xf32>
    %25 = arith.truncf %22 : vector<32x128xf32> to vector<32x128xbf16>
    %cst_16 = arith.constant dense<0.000000e+00> : vector<32x128xf32>
    %26 = tpu.matmul %25, %23, %cst_16 {dimension_numbers = #tpu.dot_dimension_numbers<[1], [0], [0], [1], [0, 0, 1, 1], [], []>} : vector<32x128xbf16>, vector<128x128xbf16>, vector<32x128xf32> -> vector<32x128xf32>
    %27 = vector.broadcast %24 : vector<1x128xf32> to vector<32x128xf32>
    %28 = arith.addf %26, %27 : vector<32x128xf32>
    %29 = arith.negf %28 : vector<32x128xf32>
    %30 = math.exp %29 : vector<32x128xf32>
    %cst_17 = arith.constant 1.000000e+00 : f32
    %31 = vector.broadcast %cst_17 : f32 to vector<32x128xf32>
    %32 = arith.addf %31, %30 : vector<32x128xf32>
    %33 = arith.divf %31, %32 : vector<32x128xf32>
    %c0_18 = arith.constant 0 : index
    %c0_19 = arith.constant 0 : index
    %34 = vector.load %arg8[%c0_18, %c0_19] : memref<32x128xf32, #tpu.memory_space<vmem>>, vector<32x128xf32>
    tpu.vector_store %arg8[%c0_18, %c0_19], %33 {strides = array<i32>} : memref<32x128xf32, #tpu.memory_space<vmem>>, vector<32x128xf32>,
    return
  }
  func.func @transform_0(%arg0: i32) -> (i32, i32) {
    %c0_i32 = arith.constant 0 : i32
    %c0_i32_0 = arith.constant 0 : i32
    return %arg0, %c0_i32 : i32, i32
  }
  func.func @transform_1(%arg0: i32) -> (i32, i32) {
    %c0_i32 = arith.constant 0 : i32
    %c0_i32_0 = arith.constant 0 : i32
    %c0_i32_1 = arith.constant 0 : i32
    return %c0_i32, %c0_i32_0 : i32, i32
  }
  func.func @transform_2(%arg0: i32) -> (i32, i32) {
    %c0_i32 = arith.constant 0 : i32
    %c0_i32_0 = arith.constant 0 : i32
    %c0_i32_1 = arith.constant 0 : i32
    return %c0_i32, %c0_i32_0 : i32, i32
  }
  func.func @transform_3(%arg0: i32) -> (i32, i32) {
    %c0_i32 = arith.constant 0 : i32
    %c0_i32_0 = arith.constant 0 : i32
    %c0_i32_1 = arith.constant 0 : i32
    return %c0_i32, %c0_i32_0 : i32, i32
  }
  func.func @transform_4(%arg0: i32) -> (i32, i32) {
    %c0_i32 = arith.constant 0 : i32
    %c0_i32_0 = arith.constant 0 : i32
    %c0_i32_1 = arith.constant 0 : i32
    return %c0_i32, %c0_i32_0 : i32, i32
  }
  func.func @transform_5(%arg0: i32) -> (i32, i32) {
    %c0_i32 = arith.constant 0 : i32
    %c0_i32_0 = arith.constant 0 : i32
    %c0_i32_1 = arith.constant 0 : i32
    return %c0_i32, %c0_i32_0 : i32, i32
  }
  func.func @transform_6(%arg0: i32) -> (i32, i32) {
    %c0_i32 = arith.constant 0 : i32
    %c0_i32_0 = arith.constant 0 : i32
    %c0_i32_1 = arith.constant 0 : i32
    return %c0_i32, %c0_i32_0 : i32, i32
  }
  func.func @transform_7(%arg0: i32) -> (i32, i32) {
    %c0_i32 = arith.constant 0 : i32
    %c0_i32_0 = arith.constant 0 : i32
    return %arg0, %c0_i32 : i32, i32
  }
}

</mosaic_0001>

<llo_original>
// kernel: tpu_custom_call.1
$region0: #{tpu_custom_call.1}
  #allocation0 [shape = 'u32[]', space=smem, size = 0x4, offset = 0x4, fixed_abs, tag = 'smem constant byte address 0x4 - core index']
  #allocation1 [shape = 'u32[144,128]{1,0:T(1,128)}', space=vmem, size = 0x12000, scoped, tag = 'internal scratch']
  %s0 = inlined_call_operand.hbm [shape: f32[64,128], index: 0, kind: input, shape index: {}]
  %s1 = inlined_call_operand.hbm [shape: bf16[128,128], index: 1, kind: input, shape index: {}]
  %s2 = inlined_call_operand.vmem [shape: f32[1,128], index: 2, kind: input, shape index: {}]
  %s3 = inlined_call_operand.hbm [shape: bf16[128,128], index: 3, kind: input, shape index: {}]
  %s4 = inlined_call_operand.vmem [shape: f32[1,128], index: 4, kind: input, shape index: {}]
  %s5 = inlined_call_operand.hbm [shape: bf16[128,128], index: 5, kind: input, shape index: {}]
  %s6 = inlined_call_operand.vmem [shape: f32[1,128], index: 6, kind: input, shape index: {}]
  %s7 = inlined_call_operand.hbm [shape: f32[64,128], index: 7, kind: output, shape index: {}]
  %s8 = sld [smem:[#allocation0]]
  $region77: #{tpu_custom_call.1} parent=0
    _
  %s10 = ssub.s32 1, %s8
  %s11 = scalar_select 0, %s10, %s8
  $region1: #{tpu_custom_call.1} parent=0
    #allocation2 [shape = 'u8[32768]{0}', space=vmem, size = 0x8000, scoped, tag = 'input window, operand 0']
    #allocation3 [shape = 's32[2]{0}', space=sflag, size = 0x8, scoped, tag = 'scoped memory for tpu_custom_call.1']
    #allocation4 [shape = 's32[2]{0}', space=sflag, size = 0x8, scoped, tag = 'scoped memory for tpu_custom_call.1']
    #allocation5 [shape = 'u8[32768]{0}', space=vmem, size = 0x8000, scoped, tag = 'input window, operand 1, single buffered']
    #allocation6 [shape = 's32[1]{0}', space=sflag, size = 0x4, scoped, tag = 'scoped memory for tpu_custom_call.1']
    #allocation7 [shape = 'u8[32768]{0}', space=vmem, size = 0x8000, scoped, tag = 'input window, operand 3, single buffered']
    #allocation8 [shape = 'u8[32768]{0}', space=vmem, size = 0x8000, scoped, tag = 'input window, operand 5, single buffered']
    #allocation9 [shape = 's32[1]{0}', space=sflag, size = 0x4, scoped, tag = 'scoped memory for tpu_custom_call.1']
    #allocation10 [shape = 'u8[32768]{0}', space=vmem, size = 0x8000, scoped, tag = 'output window, operand 0']
    %12 = vsyncpa [#allocation3], 0
    %s13 = scalar_lea.sflag [#allocation3], 1
    %14 = vsyncpa %s13, 0
    %15 = vsyncpa [#allocation6], 0
    %16 = vsyncpa [#allocation9], 0
    %17 = vsyncpa [#allocation4], 0
    %s18 = scalar_lea.sflag [#allocation4], 1
    %19 = vsyncpa %s18, 0
    loop: start=0, step=1, limit=4
    $region2: #{tpu_custom_call.1} parent=1 // loop_pre_header
      _
    $region3: #{tpu_custom_call.1} parent=1 // loop_header
      %s21 = sphi 0, %s25
      %p22 = scmp.ge.s32.totalorder %s21, 4
      %s31 = sphi 0, %s33
      %s34 = sphi 0, %s31
      %s35 = sphi 0, %s34
      %s51 = sphi 0, %s35
      %s55 = sphi 0, %s55
      %s57 = sphi 0, %s55
      %s58 = sphi 0, %s57
      %s72 = sphi 0, %s58
      %s76 = sphi 0, %s76
      %s78 = sphi 0, %s76
      %s79 = sphi 0, %s78
      %s93 = sphi 0, %s79
      %s97 = sphi 0, %s97
      %s99 = sphi 0, %s97
      %s100 = sphi 0, %s99
      %s114 = sphi 0, %s100
      %s118 = sphi 0, %s118
      %s120 = sphi 0, %s118
      %s121 = sphi 0, %s120
      %s135 = sphi 0, %s121
      %s139 = sphi 0, %s139
      %s141 = sphi 0, %s139
      %s142 = sphi 0, %s141
      %s156 = sphi 0, %s142
      %s160 = sphi 0, %s160
      %s162 = sphi 0, %s160
      %s163 = sphi 0, %s162
      %s177 = sphi 0, %s163
      %s183 = sphi 0, %s185
      %s186 = sphi 0, %s183
      %s187 = sphi 0, %s186
      %s203 = sphi 0, %s187
    $region4: #{tpu_custom_call.1} parent=1 // loop_header_branch
      %24 = sbr.rel (%p22) target = $region8
    $region5: #{tpu_custom_call.1} parent=1 // loop_body
      %s26 = ssub.s32 %s21, 1
      %s27 = ssub.s32 %s21, 2
      %s28 = sadd.s32 %s21, 1
      %s29 = ssub.s32 %s21, %s28
      %p30 = scmp.eq.s32.totalorder %s29, 0
      %s32 = sadd.s32 %s31, 1
      %s33 = scalar_select %p30, %s31, %s32
      %p36 = pneg %p30
      %p37 = scmp.eq.s32.totalorder %s21, 1
      %p38 = por %p36, %p37
      %p39 = scmp.ne.s32.totalorder %s31, %s34
      %p40 = scmp.eq.s32.totalorder %s21, 0
      %p41 = por %p39, %p40
      %p42 = scmp.ne.s32.totalorder %s31, %s34
      %p43 = scmp.eq.s32.totalorder %s26, 1
      %p44 = por %p42, %p43
      %p45 = scmp.ne.s32.totalorder %s34, %s35
      %p46 = scmp.eq.s32.totalorder %s26, 0
      %p47 = por %p45, %p46
      %p48 = scmp.ne.s32.totalorder %s34, %s35
      %p49 = scmp.eq.s32.totalorder %s27, 1
      %p50 = por %p48, %p49
      %p52 = scmp.ne.s32.totalorder %s35, %s51
      %p53 = scmp.eq.s32.totalorder %s27, 0
      %p54 = por %p52, %p53
      %s56 = sadd.s32 %s55, 1
      %p59 = scmp.eq.s32.totalorder %s21, 1
      %p60 = scmp.ne.s32.totalorder %s55, %s57
      %p61 = scmp.eq.s32.totalorder %s21, 0
      %p62 = por %p60, %p61
      %p63 = scmp.ne.s32.totalorder %s55, %s57
      %p64 = scmp.eq.s32.totalorder %s26, 1
      %p65 = por %p63, %p64
      %p66 = scmp.ne.s32.totalorder %s57, %s58
      %p67 = scmp.eq.s32.totalorder %s26, 0
      %p68 = por %p66, %p67
      %p69 = scmp.ne.s32.totalorder %s57, %s58
      %p70 = scmp.eq.s32.totalorder %s27, 1
      %p71 = por %p69, %p70
      %p73 = scmp.ne.s32.totalorder %s58, %s72
      %p74 = scmp.eq.s32.totalorder %s27, 0
      %p75 = por %p73, %p74
      %s77 = sadd.s32 %s76, 1
      %p80 = scmp.eq.s32.totalorder %s21, 1
      %p81 = scmp.ne.s32.totalorder %s76, %s78
      %p82 = scmp.eq.s32.totalorder %s21, 0
      %p83 = por %p81, %p82
      %p84 = scmp.ne.s32.totalorder %s76, %s78
      %p85 = scmp.eq.s32.totalorder %s26, 1
      %p86 = por %p84, %p85
      %p87 = scmp.ne.s32.totalorder %s78, %s79
      %p88 = scmp.eq.s32.totalorder %s26, 0
      %p89 = por %p87, %p88
      %p90 = scmp.ne.s32.totalorder %s78, %s79
      %p91 = scmp.eq.s32.totalorder %s27, 1
      %p92 = por %p90, %p91
      %p94 = scmp.ne.s32.totalorder %s79, %s93
      %p95 = scmp.eq.s32.totalorder %s27, 0
      %p96 = por %p94, %p95
      %s98 = sadd.s32 %s97, 1
      %p101 = scmp.eq.s32.totalorder %s21, 1
      %p102 = scmp.ne.s32.totalorder %s97, %s99
      %p103 = scmp.eq.s32.totalorder %s21, 0
      %p104 = por %p102, %p103
      %p105 = scmp.ne.s32.totalorder %s97, %s99
      %p106 = scmp.eq.s32.totalorder %s26, 1
      %p107 = por %p105, %p106
      %p108 = scmp.ne.s32.totalorder %s99, %s100
      %p109 = scmp.eq.s32.totalorder %s26, 0
      %p110 = por %p108, %p109
      %p111 = scmp.ne.s32.totalorder %s99, %s100
      %p112 = scmp.eq.s32.totalorder %s27, 1
      %p113 = por %p111, %p112
      %p115 = scmp.ne.s32.totalorder %s100, %s114
      %p116 = scmp.eq.s32.totalorder %s27, 0
      %p117 = por %p115, %p116
      %s119 = sadd.s32 %s118, 1
      %p122 = scmp.eq.s32.totalorder %s21, 1
      %p123 = scmp.ne.s32.totalorder %s118, %s120
      %p124 = scmp.eq.s32.totalorder %s21, 0
      %p125 = por %p123, %p124
      %p126 = scmp.ne.s32.totalorder %s118, %s120
      %p127 = scmp.eq.s32.totalorder %s26, 1
      %p128 = por %p126, %p127
      %p129 = scmp.ne.s32.totalorder %s120, %s121
      %p130 = scmp.eq.s32.totalorder %s26, 0
      %p131 = por %p129, %p130
      %p132 = scmp.ne.s32.totalorder %s120, %s121
      %p133 = scmp.eq.s32.totalorder %s27, 1
      %p134 = por %p132, %p133
      %p136 = scmp.ne.s32.totalorder %s121, %s135
      %p137 = scmp.eq.s32.totalorder %s27, 0
      %p138 = por %p136, %p137
      %s140 = sadd.s32 %s139, 1
      %p143 = scmp.eq.s32.totalorder %s21, 1
      %p144 = scmp.ne.s32.totalorder %s139, %s141
      %p145 = scmp.eq.s32.totalorder %s21, 0
      %p146 = por %p144, %p145
      %p147 = scmp.ne.s32.totalorder %s139, %s141
      %p148 = scmp.eq.s32.totalorder %s26, 1
      %p149 = por %p147, %p148
      %p150 = scmp.ne.s32.totalorder %s141, %s142
      %p151 = scmp.eq.s32.totalorder %s26, 0
      %p152 = por %p150, %p151
      %p153 = scmp.ne.s32.totalorder %s141, %s142
      %p154 = scmp.eq.s32.totalorder %s27, 1
      %p155 = por %p153, %p154
      %p157 = scmp.ne.s32.totalorder %s142, %s156
      %p158 = scmp.eq.s32.totalorder %s27, 0
      %p159 = por %p157, %p158
      %s161 = sadd.s32 %s160, 1
      %p164 = scmp.eq.s32.totalorder %s21, 1
      %p165 = scmp.ne.s32.totalorder %s160, %s162
      %p166 = scmp.eq.s32.totalorder %s21, 0
      %p167 = por %p165, %p166
      %p168 = scmp.ne.s32.totalorder %s160, %s162
      %p169 = scmp.eq.s32.totalorder %s26, 1
      %p170 = por %p168, %p169
      %p171 = scmp.ne.s32.totalorder %s162, %s163
      %p172 = scmp.eq.s32.totalorder %s26, 0
      %p173 = por %p171, %p172
      %p174 = scmp.ne.s32.totalorder %s162, %s163
      %p175 = scmp.eq.s32.totalorder %s27, 1
      %p176 = por %p174, %p175
      %p178 = scmp.ne.s32.totalorder %s163, %s177
      %p179 = scmp.eq.s32.totalorder %s27, 0
      %p180 = por %p178, %p179
      %s181 = ssub.s32 %s21, %s28
      %p182 = scmp.eq.s32.totalorder %s181, 0
      %s184 = sadd.s32 %s183, 1
      %s185 = scalar_select %p182, %s183, %s184
      %p188 = pneg %p182
      %p189 = scmp.eq.s32.totalorder %s21, 1
      %p190 = por %p188, %p189
      %p191 = scmp.ne.s32.totalorder %s183, %s186
      %p192 = scmp.eq.s32.totalorder %s21, 0
      %p193 = por %p191, %p192
      %p194 = scmp.ne.s32.totalorder %s183, %s186
      %p195 = scmp.eq.s32.totalorder %s26, 1
      %p196 = por %p194, %p195
      %p197 = scmp.ne.s32.totalorder %s186, %s187
      %p198 = scmp.eq.s32.totalorder %s26, 0
      %p199 = por %p197, %p198
      %p200 = scmp.ne.s32.totalorder %s186, %s187
      %p201 = scmp.eq.s32.totalorder %s27, 1
      %p202 = por %p200, %p201
      %p204 = scmp.ne.s32.totalorder %s187, %s203
      %p205 = scmp.eq.s32.totalorder %s27, 0
      %p206 = por %p204, %p205
      %p207 = scmp.le.s32.totalorder 1, %s21
      %p208 = scmp.lt.s32.totalorder %s21, 3
      %p209 = pnand %p207, %p208
      %p210 = pneg %p209
      // Predicated region
      $region9: #{tpu_custom_call.1} parent=5 // pred_check
        _
      $region10: #{tpu_custom_call.1} parent=5 // pred_check_branch
        %212 = sbr.rel (%p209) target = $region12
      $region11: #{tpu_custom_call.1} parent=5 // pred_region
        %s213 = ssub.s32 %s21, 1
        // Predicated region
        $region13: #{tpu_custom_call.1} parent=11 // pred_check
          %p214 = pneg %p68
        $region14: #{tpu_custom_call.1} parent=11 // pred_check_branch
          %216 = sbr.rel (%p214) target = $region16
        $region15: #{tpu_custom_call.1} parent=11 // pred_region
          %s218 = ssub.s32 1024, 1024
          %219 = vsyncadd [#allocation6], %s218
          %s220 = sshll.u32 [#allocation5], 4
          %s221 = int_to_ptr.vmem [resolvable:$true] %s220
          %226 = dma.hbm_to_vmem [thread:$0]  %s1, 1024, %s221, [#allocation6], 64, 64, 4
        $region16: #{tpu_custom_call.1} parent=11 // pred_fallthru
          _
        // Predicated region
        $region17: #{tpu_custom_call.1} parent=11 // pred_check
          %p227 = pneg %p89
        $region18: #{tpu_custom_call.1} parent=11 // pred_check_branch
          %229 = sbr.rel (%p227) target = $region20
        $region19: #{tpu_custom_call.1} parent=11 // pred_region
          _
        $region20: #{tpu_custom_call.1} parent=11 // pred_fallthru
          _
        // Predicated region
        $region21: #{tpu_custom_call.1} parent=11 // pred_check
          %p230 = pneg %p110
        $region22: #{tpu_custom_call.1} parent=11 // pred_check_branch
          %232 = sbr.rel (%p230) target = $region24
        $region23: #{tpu_custom_call.1} parent=11 // pred_region
          %s234 = ssub.s32 1024, 1024
          %235 = vsyncadd [#allocation6], %s234
          %s236 = sshll.u32 [#allocation7], 4
          %s237 = int_to_ptr.vmem [resolvable:$true] %s236
          %242 = dma.hbm_to_vmem [thread:$0]  %s3, 1024, %s237, [#allocation6], 64, 64, 4
        $region24: #{tpu_custom_call.1} parent=11 // pred_fallthru
          _
        // Predicated region
        $region25: #{tpu_custom_call.1} parent=11 // pred_check
          %p243 = pneg %p131
        $region26: #{tpu_custom_call.1} parent=11 // pred_check_branch
          %245 = sbr.rel (%p243) target = $region28
        $region27: #{tpu_custom_call.1} parent=11 // pred_region
          _
        $region28: #{tpu_custom_call.1} parent=11 // pred_fallthru
          _
        // Predicated region
        $region29: #{tpu_custom_call.1} parent=11 // pred_check
          %p246 = pneg %p152
        $region30: #{tpu_custom_call.1} parent=11 // pred_check_branch
          %248 = sbr.rel (%p246) target = $region32
        $region31: #{tpu_custom_call.1} parent=11 // pred_region
          %s250 = ssub.s32 1024, 1024
          %251 = vsyncadd [#allocation9], %s250
          %s252 = sshll.u32 [#allocation8], 4
          %s253 = int_to_ptr.vmem [resolvable:$true] %s252
          %258 = dma.hbm_to_vmem [thread:$0]  %s5, 1024, %s253, [#allocation9], 64, 64, 4
        $region32: #{tpu_custom_call.1} parent=11 // pred_fallthru
          _
        // Predicated region
        $region33: #{tpu_custom_call.1} parent=11 // pred_check
          %p259 = pneg %p173
        $region34: #{tpu_custom_call.1} parent=11 // pred_check_branch
          %261 = sbr.rel (%p259) target = $region36
        $region35: #{tpu_custom_call.1} parent=11 // pred_region
          _
        $region36: #{tpu_custom_call.1} parent=11 // pred_fallthru
          _
      $region12: #{tpu_custom_call.1} parent=5 // pred_fallthru
        _
      %p262 = scmp.lt.s32.totalorder %s21, 2
      // Predicated region
      $region37: #{tpu_custom_call.1} parent=5 // pred_check
        %p263 = pneg %p262
      $region38: #{tpu_custom_call.1} parent=5 // pred_check_branch
        %265 = sbr.rel (%p263) target = $region40
      $region39: #{tpu_custom_call.1} parent=5 // pred_region
        // Predicated region
        $region41: #{tpu_custom_call.1} parent=39 // pred_check
          %p266 = pneg %p41
        $region42: #{tpu_custom_call.1} parent=39 // pred_check_branch
          %268 = sbr.rel (%p266) target = $region44
        $region43: #{tpu_custom_call.1} parent=39 // pred_region
          %s269 = sand.u32 %s31, 1
          %s270 = scalar_lea.sflag [#allocation3], %s269
          %s271 = sand.u32 %s31, 1
          %s272 = smul.addr %s271, 32
          %s273 = scalar_lea.vmem [#allocation2], %s272
          %s274 = smul.u32 4, %s21
          %s276 = ssub.s32 512, 512
          %277 = vsyncadd %s270, %s276
          %s278 = smul.addr %s274, 128
          %s279 = scalar_lea.hbm %s0, %s278
          %s280 = sshll.u32 %s273, 4
          %s281 = int_to_ptr.vmem [resolvable:$true] %s280
          %286 = dma.hbm_to_vmem [thread:$0]  %s279, 512, %s281, %s270, 128, 128, 8
        $region44: #{tpu_custom_call.1} parent=39 // pred_fallthru
          _
      $region40: #{tpu_custom_call.1} parent=5 // pred_fallthru
        _
      %p287 = scmp.le.s32.totalorder 1, %s21
      %p288 = scmp.lt.s32.totalorder %s21, 3
      %p289 = pnand %p287, %p288
      %p290 = pneg %p289
      // Predicated region
      $region45: #{tpu_custom_call.1} parent=5 // pred_check
        _
      $region46: #{tpu_custom_call.1} parent=5 // pred_check_branch
        %292 = sbr.rel (%p289) target = $region48
      $region47: #{tpu_custom_call.1} parent=5 // pred_region
        %s293 = ssub.s32 %s21, 1
        %s294 = sand.u32 %s34, 1
        %s295 = scalar_lea.sflag [#allocation3], %s294
        %s296 = sand.u32 %s34, 1
        %s297 = smul.addr %s296, 32
        %s298 = scalar_lea.vmem [#allocation2], %s297
        // Predicated region
        $region49: #{tpu_custom_call.1} parent=47 // pred_check
          %p299 = pneg %p47
        $region50: #{tpu_custom_call.1} parent=47 // pred_check_branch
          %301 = sbr.rel (%p299) target = $region52
        $region51: #{tpu_custom_call.1} parent=47 // pred_region
          %302 = dma.done %s295, 512
        $region52: #{tpu_custom_call.1} parent=47 // pred_fallthru
          _
        // Predicated region
        $region53: #{tpu_custom_call.1} parent=47 // pred_check
          %p303 = pneg %p68
        $region54: #{tpu_custom_call.1} parent=47 // pred_check_branch
          %305 = sbr.rel (%p303) target = $region56
        $region55: #{tpu_custom_call.1} parent=47 // pred_region
          %306 = dma.done [#allocation6], 1024
        $region56: #{tpu_custom_call.1} parent=47 // pred_fallthru
          _
        // Predicated region
        $region57: #{tpu_custom_call.1} parent=47 // pred_check
          %p307 = pneg %p110
        $region58: #{tpu_custom_call.1} parent=47 // pred_check_branch
          %309 = sbr.rel (%p307) target = $region60
        $region59: #{tpu_custom_call.1} parent=47 // pred_region
          %310 = dma.done [#allocation6], 1024
        $region60: #{tpu_custom_call.1} parent=47 // pred_fallthru
          _
        // Predicated region
        $region61: #{tpu_custom_call.1} parent=47 // pred_check
          %p311 = pneg %p152
        $region62: #{tpu_custom_call.1} parent=47 // pred_check_branch
          %313 = sbr.rel (%p311) target = $region64
        $region63: #{tpu_custom_call.1} parent=47 // pred_region
          %314 = dma.done [#allocation9], 1024
        $region64: #{tpu_custom_call.1} parent=47 // pred_fallthru
          _
        %s315 = sand.u32 %s34, 1
        %s316 = scalar_lea.sflag [#allocation3], %s315
        %s317 = sand.u32 %s34, 1
        %s318 = smul.addr %s317, 32
        %s319 = scalar_lea.vmem [#allocation2], %s318
        %p320 = pneg %p47
        %p321 = pneg %p44
        %p322 = pneg %p68
        %p323 = pneg %p65
        %p324 = pneg %p89
        %p325 = pneg %p86
        %p326 = pneg %p110
        %p327 = pneg %p107
        %p328 = pneg %p131
        %p329 = pneg %p128
        %p330 = pneg %p152
        %p331 = pneg %p149
        %p332 = pneg %p173
        %p333 = pneg %p170
        %p334 = pneg %p199
        %p335 = pneg %p196
        %s336 = sand.u32 %s186, 1
        %s337 = scalar_lea.sflag [#allocation4], %s336
        %s338 = sand.u32 %s186, 1
        %s339 = smul.addr %s338, 32
        %s340 = scalar_lea.vmem [#allocation10], %s339
        %s341 = smul.u32 4, %s26
        %s342 = smul.u32 4, %s26
        %v344 = vld [vmem:[%s298] sm:$0xff]
        %v345 = vld [vmem:[%s298 + $0x8] sm:$0xff]
        %v346 = vld [vmem:[%s298 + $0x10] sm:$0xff]
        %v347 = vld [vmem:[%s298 + $0x18] sm:$0xff]
        %v348 = vld [vmem:[#allocation5] sm:$0xf]
        %v349 = vld [vmem:[#allocation5 + $0x4] sm:$0xf]
        %v350 = vld [vmem:[#allocation5 + $0x8] sm:$0xf]
        %v351 = vld [vmem:[#allocation5 + $0xc] sm:$0xf]
        %v352 = vld [vmem:[#allocation5 + $0x10] sm:$0xf]
        %v353 = vld [vmem:[#allocation5 + $0x14] sm:$0xf]
        %v354 = vld [vmem:[#allocation5 + $0x18] sm:$0xf]
        %v355 = vld [vmem:[#allocation5 + $0x1c] sm:$0xf]
        %v356 = vld [vmem:[#allocation5 + $0x20] sm:$0xf]
        %v357 = vld [vmem:[#allocation5 + $0x24] sm:$0xf]
        %v358 = vld [vmem:[#allocation5 + $0x28] sm:$0xf]
        %v359 = vld [vmem:[#allocation5 + $0x2c] sm:$0xf]
        %v360 = vld [vmem:[#allocation5 + $0x30] sm:$0xf]
        %v361 = vld [vmem:[#allocation5 + $0x34] sm:$0xf]
        %v362 = vld [vmem:[#allocation5 + $0x38] sm:$0xf]
        %v363 = vld [vmem:[#allocation5 + $0x3c] sm:$0xf]
        %v364 = vld [vmem:[%s2] sm:$0x1]
        %v365 = vpack.c.bf16 %v345, %v344
        %v366 = vpack.c.bf16 %v347, %v346
        %v368 = vlaneseq
        %v369 = vshrl.u32 %v368, 7
        %v370 = vsub.s32 0, %v369
        %v371 = vrot.slane %v364, %v370
        %v389 = vunpack.c.l.b16 %v348
        %v390 = vunpack.c.l.b16 %v349
        %v391 = vunpack.c.l.b16 %v350
        %v392 = vunpack.c.l.b16 %v351
        %v393 = vunpack.c.l.b16 %v352
        %v394 = vunpack.c.l.b16 %v353
        %v395 = vunpack.c.l.b16 %v354
        %v396 = vunpack.c.l.b16 %v355
        %v397 = vunpack.c.l.b16 %v356
        %v398 = vunpack.c.l.b16 %v357
        %v399 = vunpack.c.l.b16 %v358
        %v400 = vunpack.c.l.b16 %v359
        %v401 = vunpack.c.l.b16 %v360
        %v402 = vunpack.c.l.b16 %v361
        %v403 = vunpack.c.l.b16 %v362
        %v404 = vunpack.c.l.b16 %v363
        %v405 = vpack.c.b16 %v390, %v389
        %v406 = vpack.c.b16 %v392, %v391
        %v407 = vpack.c.b16 %v394, %v393
        %v408 = vpack.c.b16 %v396, %v395
        %v409 = vpack.c.b16 %v398, %v397
        %v410 = vpack.c.b16 %v400, %v399
        %v411 = vpack.c.b16 %v402, %v401
        %v412 = vpack.c.b16 %v404, %v403
        %421 = vmatprep.subr.bf16.mxu0 0
        %422 = vmatpush1.bf16.msra.mxu0 %v412
        %423 = vmatprep.subr.bf16.mxu0 0
        %424 = vmatpush1.bf16.msra.mxu0 %v411
        %425 = vmatprep.subr.bf16.mxu0 0
        %426 = vmatpush1.bf16.msra.mxu0 %v410
        %427 = vmatprep.subr.bf16.mxu0 0
        %428 = vmatpush1.bf16.msra.mxu0 %v409
        %429 = vmatprep.subr.bf16.mxu0 0
        %430 = vmatpush1.bf16.msra.mxu0 %v408
        %431 = vmatprep.subr.bf16.mxu0 0
        %432 = vmatpush1.bf16.msra.mxu0 %v407
        %433 = vmatprep.subr.bf16.mxu0 0
        %434 = vmatpush1.bf16.msra.mxu0 %v406
        %435 = vmatprep.subr.bf16.mxu0 0
        %436 = vmatpush1.bf16.msra.mxu0 %v405
        %437 = vmatprep.subr.bf16.mxu0 0
        %438 = vmatpush2.bf16.msra.mxu0 0
        %439 = vmatprep.subr.bf16.mxu0 0
        %440 = vmatpush2.bf16.msra.mxu0 0
        %441 = vmatprep.subr.bf16.mxu0 0
        %442 = vmatpush2.bf16.msra.mxu0 0
        %443 = vmatprep.subr.bf16.mxu0 0
        %444 = vmatpush2.bf16.msra.mxu0 0
        %445 = vmatprep.subr.bf16.mxu0 0
        %446 = vmatpush2.bf16.msra.mxu0 0
        %447 = vmatprep.subr.bf16.mxu0 0
        %448 = vmatpush2.bf16.msra.mxu0 0
        %449 = vmatprep.subr.bf16.mxu0 0
        %450 = vmatpush2.bf16.msra.mxu0 0
        %451 = vmatprep.subr.bf16.mxu0 0
        %452 = vmatpush2.bf16.msra.mxu0 0
        %453 = vmatprep.mubr.bf16.mxu0 0
        %454 = vmatmul.mubr.bf16.gmra.mxu0 %v365
        %v455 = vpop.f32.mrf.mxu0
        %v456 = vadd.f32 %v371, %v455
        %v457 = vpop.f32.mrf.mxu0
        %v458 = vpop.f32.mrf.mxu0
        %v459 = vadd.f32 %v371, %v458
        %v460 = vpop.f32.mrf.mxu0
        %461 = vmatprep.mubr.bf16.mxu0 0
        %462 = vmatmul.mubr.bf16.gmra.mxu0 %v366
        %v463 = vpop.f32.mrf.mxu0
        %v464 = vadd.f32 %v371, %v463
        %v465 = vpop.f32.mrf.mxu0
        %v466 = vpop.f32.mrf.mxu0
        %v467 = vadd.f32 %v371, %v466
        %v468 = vpop.f32.mrf.mxu0
        %469 = vdwg.mxu0
        %v470 = vxor.u32 %v456, 2147483648
        %v471 = vxor.u32 %v459, 2147483648
        %v472 = vxor.u32 %v464, 2147483648
        %v473 = vxor.u32 %v467, 2147483648
        %v474 = vmul.f32 %v470, 1.442695
        %v475 = vpow.pop %v474
        %v476 = vmul.f32 %v471, 1.442695
        %v477 = vpow.pop %v476
        %v478 = vmul.f32 %v472, 1.442695
        %v479 = vpow.pop %v478
        %v480 = vmul.f32 %v473, 1.442695
        %v481 = vpow.pop %v480
        %v482 = vadd.f32 %v475, 1.0
        %v483 = vadd.f32 %v477, 1.0
        %v484 = vadd.f32 %v479, 1.0
        %v485 = vadd.f32 %v481, 1.0
        %v486 = vrcp.pop %v482
        %v487 = vmul.f32 1.0, %v486
        %v488 = vrcp.pop %v483
        %v489 = vmul.f32 1.0, %v488
        %v490 = vrcp.pop %v484
        %v491 = vmul.f32 1.0, %v490
        %v492 = vrcp.pop %v485
        %v493 = vmul.f32 1.0, %v492
        %v494 = vld [vmem:[#allocation7] sm:$0xf]
        %v495 = vld [vmem:[#allocation7 + $0x4] sm:$0xf]
        %v496 = vld [vmem:[#allocation7 + $0x8] sm:$0xf]
        %v497 = vld [vmem:[#allocation7 + $0xc] sm:$0xf]
        %v498 = vld [vmem:[#allocation7 + $0x10] sm:$0xf]
        %v499 = vld [vmem:[#allocation7 + $0x14] sm:$0xf]
        %v500 = vld [vmem:[#allocation7 + $0x18] sm:$0xf]
        %v501 = vld [vmem:[#allocation7 + $0x1c] sm:$0xf]
        %v502 = vld [vmem:[#allocation7 + $0x20] sm:$0xf]
        %v503 = vld [vmem:[#allocation7 + $0x24] sm:$0xf]
        %v504 = vld [vmem:[#allocation7 + $0x28] sm:$0xf]
        %v505 = vld [vmem:[#allocation7 + $0x2c] sm:$0xf]
        %v506 = vld [vmem:[#allocation7 + $0x30] sm:$0xf]
        %v507 = vld [vmem:[#allocation7 + $0x34] sm:$0xf]
        %v508 = vld [vmem:[#allocation7 + $0x38] sm:$0xf]
        %v509 = vld [vmem:[#allocation7 + $0x3c] sm:$0xf]
        %v510 = vld [vmem:[%s4] sm:$0x1]
        %v511 = vpack.c.bf16 %v489, %v487
        %v512 = vpack.c.bf16 %v493, %v491
        %v514 = vlaneseq
        %v515 = vshrl.u32 %v514, 7
        %v516 = vsub.s32 0, %v515
        %v517 = vrot.slane %v510, %v516
        %v535 = vunpack.c.l.b16 %v494
        %v536 = vunpack.c.l.b16 %v495
        %v537 = vunpack.c.l.b16 %v496
        %v538 = vunpack.c.l.b16 %v497
        %v539 = vunpack.c.l.b16 %v498
        %v540 = vunpack.c.l.b16 %v499
        %v541 = vunpack.c.l.b16 %v500
        %v542 = vunpack.c.l.b16 %v501
        %v543 = vunpack.c.l.b16 %v502
        %v544 = vunpack.c.l.b16 %v503
        %v545 = vunpack.c.l.b16 %v504
        %v546 = vunpack.c.l.b16 %v505
        %v547 = vunpack.c.l.b16 %v506
        %v548 = vunpack.c.l.b16 %v507
        %v549 = vunpack.c.l.b16 %v508
        %v550 = vunpack.c.l.b16 %v509
        %v551 = vpack.c.b16 %v536, %v535
        %v552 = vpack.c.b16 %v538, %v537
        %v553 = vpack.c.b16 %v540, %v539
        %v554 = vpack.c.b16 %v542, %v541
        %v555 = vpack.c.b16 %v544, %v543
        %v556 = vpack.c.b16 %v546, %v545
        %v557 = vpack.c.b16 %v548, %v547
        %v558 = vpack.c.b16 %v550, %v549
        %567 = vmatprep.subr.bf16.mxu0 0
        %568 = vmatpush1.bf16.msra.mxu0 %v558
        %569 = vmatprep.subr.bf16.mxu0 0
        %570 = vmatpush1.bf16.msra.mxu0 %v557
        %571 = vmatprep.subr.bf16.mxu0 0
        %572 = vmatpush1.bf16.msra.mxu0 %v556
        %573 = vmatprep.subr.bf16.mxu0 0
        %574 = vmatpush1.bf16.msra.mxu0 %v555
        %575 = vmatprep.subr.bf16.mxu0 0
        %576 = vmatpush1.bf16.msra.mxu0 %v554
        %577 = vmatprep.subr.bf16.mxu0 0
        %578 = vmatpush1.bf16.msra.mxu0 %v553
        %579 = vmatprep.subr.bf16.mxu0 0
        %580 = vmatpush1.bf16.msra.mxu0 %v552
        %581 = vmatprep.subr.bf16.mxu0 0
        %582 = vmatpush1.bf16.msra.mxu0 %v551
        %583 = vmatprep.subr.bf16.mxu0 0
        %584 = vmatpush2.bf16.msra.mxu0 0
        %585 = vmatprep.subr.bf16.mxu0 0
        %586 = vmatpush2.bf16.msra.mxu0 0
        %587 = vmatprep.subr.bf16.mxu0 0
        %588 = vmatpush2.bf16.msra.mxu0 0
        %589 = vmatprep.subr.bf16.mxu0 0
        %590 = vmatpush2.bf16.msra.mxu0 0
        %591 = vmatprep.subr.bf16.mxu0 0
        %592 = vmatpush2.bf16.msra.mxu0 0
        %593 = vmatprep.subr.bf16.mxu0 0
        %594 = vmatpush2.bf16.msra.mxu0 0
        %595 = vmatprep.subr.bf16.mxu0 0
        %596 = vmatpush2.bf16.msra.mxu0 0
        %597 = vmatprep.subr.bf16.mxu0 0
        %598 = vmatpush2.bf16.msra.mxu0 0
        %599 = vmatprep.mubr.bf16.mxu0 0
        %600 = vmatmul.mubr.bf16.gmra.mxu0 %v511
        %v601 = vpop.f32.mrf.mxu0
        %v602 = vadd.f32 %v517, %v601
        %v603 = vpop.f32.mrf.mxu0
        %v604 = vpop.f32.mrf.mxu0
        %v605 = vadd.f32 %v517, %v604
        %v606 = vpop.f32.mrf.mxu0
        %607 = vmatprep.mubr.bf16.mxu0 0
        %608 = vmatmul.mubr.bf16.gmra.mxu0 %v512
        %v609 = vpop.f32.mrf.mxu0
        %v610 = vadd.f32 %v517, %v609
        %v611 = vpop.f32.mrf.mxu0
        %v612 = vpop.f32.mrf.mxu0
        %v613 = vadd.f32 %v517, %v612
        %v614 = vpop.f32.mrf.mxu0
        %615 = vdwg.mxu0
        %v616 = vxor.u32 %v602, 2147483648
        %v617 = vxor.u32 %v605, 2147483648
        %v618 = vxor.u32 %v610, 2147483648
        %v619 = vxor.u32 %v613, 2147483648
        %v620 = vmul.f32 %v616, 1.442695
        %v621 = vpow.pop %v620
        %v622 = vmul.f32 %v617, 1.442695
        %v623 = vpow.pop %v622
        %v624 = vmul.f32 %v618, 1.442695
        %v625 = vpow.pop %v624
        %v626 = vmul.f32 %v619, 1.442695
        %v627 = vpow.pop %v626
        %v628 = vadd.f32 %v621, 1.0
        %v629 = vadd.f32 %v623, 1.0
        %v630 = vadd.f32 %v625, 1.0
        %v631 = vadd.f32 %v627, 1.0
        %v632 = vrcp.pop %v628
        %v633 = vmul.f32 1.0, %v632
        %v634 = vrcp.pop %v629
        %v635 = vmul.f32 1.0, %v634
        %v636 = vrcp.pop %v630
        %v637 = vmul.f32 1.0, %v636
        %v638 = vrcp.pop %v631
        %v639 = vmul.f32 1.0, %v638
        %v640 = vld [vmem:[#allocation8] sm:$0xf]
        %v641 = vld [vmem:[#allocation8 + $0x4] sm:$0xf]
        %v642 = vld [vmem:[#allocation8 + $0x8] sm:$0xf]
        %v643 = vld [vmem:[#allocation8 + $0xc] sm:$0xf]
        %v644 = vld [vmem:[#allocation8 + $0x10] sm:$0xf]
        %v645 = vld [vmem:[#allocation8 + $0x14] sm:$0xf]
        %v646 = vld [vmem:[#allocation8 + $0x18] sm:$0xf]
        %v647 = vld [vmem:[#allocation8 + $0x1c] sm:$0xf]
        %v648 = vld [vmem:[#allocation8 + $0x20] sm:$0xf]
        %v649 = vld [vmem:[#allocation8 + $0x24] sm:$0xf]
        %v650 = vld [vmem:[#allocation8 + $0x28] sm:$0xf]
        %v651 = vld [vmem:[#allocation8 + $0x2c] sm:$0xf]
        %v652 = vld [vmem:[#allocation8 + $0x30] sm:$0xf]
        %v653 = vld [vmem:[#allocation8 + $0x34] sm:$0xf]
        %v654 = vld [vmem:[#allocation8 + $0x38] sm:$0xf]
        %v655 = vld [vmem:[#allocation8 + $0x3c] sm:$0xf]
        %v656 = vld [vmem:[%s6] sm:$0x1]
        %v657 = vpack.c.bf16 %v635, %v633
        %v658 = vpack.c.bf16 %v639, %v637
        %v660 = vlaneseq
        %v661 = vshrl.u32 %v660, 7
        %v662 = vsub.s32 0, %v661
        %v663 = vrot.slane %v656, %v662
        %v681 = vunpack.c.l.b16 %v640
        %v682 = vunpack.c.l.b16 %v641
        %v683 = vunpack.c.l.b16 %v642
        %v684 = vunpack.c.l.b16 %v643
        %v685 = vunpack.c.l.b16 %v644
        %v686 = vunpack.c.l.b16 %v645
        %v687 = vunpack.c.l.b16 %v646
        %v688 = vunpack.c.l.b16 %v647
        %v689 = vunpack.c.l.b16 %v648
        %v690 = vunpack.c.l.b16 %v649
        %v691 = vunpack.c.l.b16 %v650
        %v692 = vunpack.c.l.b16 %v651
        %v693 = vunpack.c.l.b16 %v652
        %v694 = vunpack.c.l.b16 %v653
        %v695 = vunpack.c.l.b16 %v654
        %v696 = vunpack.c.l.b16 %v655
        %v697 = vpack.c.b16 %v682, %v681
        %v698 = vpack.c.b16 %v684, %v683
        %v699 = vpack.c.b16 %v686, %v685
        %v700 = vpack.c.b16 %v688, %v687
        %v701 = vpack.c.b16 %v690, %v689
        %v702 = vpack.c.b16 %v692, %v691
        %v703 = vpack.c.b16 %v694, %v693
        %v704 = vpack.c.b16 %v696, %v695
        %713 = vmatprep.subr.bf16.mxu0 0
        %714 = vmatpush1.bf16.msra.mxu0 %v704
        %715 = vmatprep.subr.bf16.mxu0 0
        %716 = vmatpush1.bf16.msra.mxu0 %v703
        %717 = vmatprep.subr.bf16.mxu0 0
        %718 = vmatpush1.bf16.msra.mxu0 %v702
        %719 = vmatprep.subr.bf16.mxu0 0
        %720 = vmatpush1.bf16.msra.mxu0 %v701
        %721 = vmatprep.subr.bf16.mxu0 0
        %722 = vmatpush1.bf16.msra.mxu0 %v700
        %723 = vmatprep.subr.bf16.mxu0 0
        %724 = vmatpush1.bf16.msra.mxu0 %v699
        %725 = vmatprep.subr.bf16.mxu0 0
        %726 = vmatpush1.bf16.msra.mxu0 %v698
        %727 = vmatprep.subr.bf16.mxu0 0
        %728 = vmatpush1.bf16.msra.mxu0 %v697
        %729 = vmatprep.subr.bf16.mxu0 0
        %730 = vmatpush2.bf16.msra.mxu0 0
        %731 = vmatprep.subr.bf16.mxu0 0
        %732 = vmatpush2.bf16.msra.mxu0 0
        %733 = vmatprep.subr.bf16.mxu0 0
        %734 = vmatpush2.bf16.msra.mxu0 0
        %735 = vmatprep.subr.bf16.mxu0 0
        %736 = vmatpush2.bf16.msra.mxu0 0
        %737 = vmatprep.subr.bf16.mxu0 0
        %738 = vmatpush2.bf16.msra.mxu0 0
        %739 = vmatprep.subr.bf16.mxu0 0
        %740 = vmatpush2.bf16.msra.mxu0 0
        %741 = vmatprep.subr.bf16.mxu0 0
        %742 = vmatpush2.bf16.msra.mxu0 0
        %743 = vmatprep.subr.bf16.mxu0 0
        %744 = vmatpush2.bf16.msra.mxu0 0
        %745 = vmatprep.mubr.bf16.mxu0 0
        %746 = vmatmul.mubr.bf16.gmra.mxu0 %v657
        %v747 = vpop.f32.mrf.mxu0
        %v748 = vadd.f32 %v663, %v747
        %v749 = vpop.f32.mrf.mxu0
        %v750 = vpop.f32.mrf.mxu0
        %v751 = vadd.f32 %v663, %v750
        %v752 = vpop.f32.mrf.mxu0
        %753 = vmatprep.mubr.bf16.mxu0 0
        %754 = vmatmul.mubr.bf16.gmra.mxu0 %v658
        %v755 = vpop.f32.mrf.mxu0
        %v756 = vadd.f32 %v663, %v755
        %v757 = vpop.f32.mrf.mxu0
        %v758 = vpop.f32.mrf.mxu0
        %v759 = vadd.f32 %v663, %v758
        %v760 = vpop.f32.mrf.mxu0
        %761 = vdwg.mxu0
        %v762 = vxor.u32 %v748, 2147483648
        %v763 = vxor.u32 %v751, 2147483648
        %v764 = vxor.u32 %v756, 2147483648
        %v765 = vxor.u32 %v759, 2147483648
        %v766 = vmul.f32 %v762, 1.442695
        %v767 = vpow.pop %v766
        %v768 = vmul.f32 %v763, 1.442695
        %v769 = vpow.pop %v768
        %v770 = vmul.f32 %v764, 1.442695
        %v771 = vpow.pop %v770
        %v772 = vmul.f32 %v765, 1.442695
        %v773 = vpow.pop %v772
        %v774 = vadd.f32 %v767, 1.0
        %v775 = vadd.f32 %v769, 1.0
        %v776 = vadd.f32 %v771, 1.0
        %v777 = vadd.f32 %v773, 1.0
        %v778 = vrcp.pop %v774
        %v779 = vmul.f32 1.0, %v778
        %v780 = vrcp.pop %v775
        %v781 = vmul.f32 1.0, %v780
        %v782 = vrcp.pop %v776
        %v783 = vmul.f32 1.0, %v782
        %v784 = vrcp.pop %v777
        %v785 = vmul.f32 1.0, %v784
        %786 = vst [vmem:[%s340] sm:$0xff] %v779
        %787 = vst [vmem:[%s340 + $0x8] sm:$0xff] %v781
        %788 = vst [vmem:[%s340 + $0x10] sm:$0xff] %v783
        %789 = vst [vmem:[%s340 + $0x18] sm:$0xff] %v785
        %s790 = sand.u32 %s186, 1
        %s791 = scalar_lea.sflag [#allocation4], %s790
        %s792 = sand.u32 %s186, 1
        %s793 = smul.addr %s792, 32
        %s794 = scalar_lea.vmem [#allocation10], %s793
        // Predicated region
        $region65: #{tpu_custom_call.1} parent=47 // pred_check
          %p795 = pneg %p196
        $region66: #{tpu_custom_call.1} parent=47 // pred_check_branch
          %797 = sbr.rel (%p795) target = $region68
        $region67: #{tpu_custom_call.1} parent=47 // pred_region
          %s798 = smul.u32 4, %s26
          %s800 = ssub.s32 512, 512
          %801 = vsyncadd %s791, %s800
          %s802 = smul.addr %s798, 128
          %s803 = scalar_lea.hbm %s7, %s802
          %s804 = sshll.u32 %s794, 4
          %s805 = int_to_ptr.vmem [resolvable:$true] %s804
          %810 = dma.vmem_to_hbm [thread:$0]  %s805, 512, %s803, %s791, 128, 128, 8
        $region68: #{tpu_custom_call.1} parent=47 // pred_fallthru
          _
      $region48: #{tpu_custom_call.1} parent=5 // pred_fallthru
        _
      %p811 = scmp.le.s32.totalorder 2, %s21
      // Predicated region
      $region69: #{tpu_custom_call.1} parent=5 // pred_check
        %p812 = pneg %p811
      $region70: #{tpu_custom_call.1} parent=5 // pred_check_branch
        %814 = sbr.rel (%p812) target = $region72
      $region71: #{tpu_custom_call.1} parent=5 // pred_region
        %s815 = ssub.s32 %s21, 2
        // Predicated region
        $region73: #{tpu_custom_call.1} parent=71 // pred_check
          %p816 = pneg %p202
        $region74: #{tpu_custom_call.1} parent=71 // pred_check_branch
          %818 = sbr.rel (%p816) target = $region76
        $region75: #{tpu_custom_call.1} parent=71 // pred_region
          %s819 = sand.u32 %s187, 1
          %s820 = scalar_lea.sflag [#allocation4], %s819
          %s821 = sand.u32 %s187, 1
          %s822 = smul.addr %s821, 32
          %s823 = scalar_lea.vmem [#allocation10], %s822
          %824 = dma.done %s820, 512
        $region76: #{tpu_custom_call.1} parent=71 // pred_fallthru
          _
      $region72: #{tpu_custom_call.1} parent=5 // pred_fallthru
        _
    $region6: #{tpu_custom_call.1} parent=1 // loop_footer
      %s25 = sadd.s32 1, %s21
    $region7: #{tpu_custom_call.1} parent=1 // loop_footer_branch
      %20 = sbr.rel target = $region3
    $region8: #{tpu_custom_call.1} parent=1 // loop_exit
      _
    %825 = vsyncpa [#allocation3], 1
    %s826 = scalar_lea.sflag [#allocation3], 1
    %827 = vsyncpa %s826, 1
    %828 = vsyncpa [#allocation6], 1
    %829 = vsyncpa [#allocation9], 1
    %830 = vsyncpa [#allocation4], 1
    %s831 = scalar_lea.sflag [#allocation4], 1
    %832 = vsyncpa %s831, 1

</llo_original>
